<compile_context>
chip_gen: v5e
topology: v5e:2x2
jax: 0.10.0
libtpu: 0.0.40
codegen_flags: <defaults>
</compile_context>

<pallas_src>
import math

import jax
import jax.numpy as jnp
from jax.experimental import pallas as pl
from jax.experimental.pallas import tpu as pltpu


# ---------------------------------------------------------------------------
# Kernel 1 (preferred materialization): direct HBM -> HBM DMA copy.
#   Removes the HBM->VMEM->vreg->VMEM->HBM round trip of a BlockSpec copy:
#   a single large contiguous DMA, no VMEM usage at all.
# ---------------------------------------------------------------------------
def _hbm_copy_kernel(x_ref, o_ref, sem):
    cp = pltpu.make_async_copy(x_ref, o_ref, sem)
    cp.start()
    cp.wait()


def _materialize_dma(flat: jax.Array) -> jax.Array:
    return pl.pallas_call(
        _hbm_copy_kernel,
        out_shape=jax.ShapeDtypeStruct(flat.shape, flat.dtype),
        in_specs=[pl.BlockSpec(memory_space=pl.ANY)],
        out_specs=pl.BlockSpec(memory_space=pl.ANY),
        scratch_shapes=[pltpu.SemaphoreType.DMA(())],
    )(flat)


# ---------------------------------------------------------------------------
# Kernel 2 (alternative materialization): tiled identity copy through VMEM,
#   using BlockSpec auto-pipelining over a re-blocked lane-dense slab.
# ---------------------------------------------------------------------------
def _tile_copy_kernel(x_ref, o_ref):
    o_ref[...] = x_ref[...]


def _target_tile_bytes() -> int:
    """Per-generation tile budget: ~8 MiB on v7x (3.2 TB/s HBM per TC),
    ~2 MiB on v5e/v6e (already ~85% of roofline there)."""
    try:
        kind = jax.devices()[0].device_kind.lower()
    except Exception:
        kind = ""
    if "v7" in kind:
        return 8 * 1024 * 1024
    return 2 * 1024 * 1024


def _choose_block(rows, cols, itemsize, sub, target_bytes):
    """Pick a (rb, cb) block: full row width when it fits the budget (one
    contiguous HBM range per DMA), dtype-aware sublane rounding otherwise."""
    # Lane (last) dim: prefer the full extent; only split columns when even a
    # single `sub`-row slab would exceed the tile budget.
    if cols <= 128 or sub * cols * itemsize <= target_bytes:
        cb = cols
    else:
        cb = max(128, min((cols // 128) * 128,
                          (target_bytes // (sub * itemsize)) // 128 * 128))
    # Sublane (second-to-last) dim: full extent if small, else a multiple of
    # the native packed sublane count for this dtype.
    if rows <= sub:
        rb = rows
    else:
        rows_target = max(sub, target_bytes // max(1, cb * itemsize))
        rb = max(sub, (min(rows, rows_target) // sub) * sub)
    return rb, cb


def _materialize_tiled(flat: jax.Array) -> jax.Array:
    n, feat = flat.shape
    total = n * feat
    itemsize = jnp.dtype(flat.dtype).itemsize
    sub = max(8, 32 // itemsize)          # native sublane pack: f32=8, bf16=16, i8=32
    target = _target_tile_bytes()

    # Decouple tiling from the logical (N, F) shape: re-view the contiguous
    # buffer as a lane-dense (rows, lanes) slab when an exact power-of-two
    # lane factorization exists (avoids tiny-sublane tiles for small N and
    # masked lane edges for ragged F).  Otherwise fall back to the (N, F)
    # view; partial edge blocks keep it correct.
    rows, lanes = n, feat
    for c in (8192, 4096, 2048, 1024, 512, 256, 128):
        if total % c == 0:
            rows, lanes = total // c, c
            break
    slab = flat.reshape(rows, lanes)       # free metadata reshape

    rb, cb = _choose_block(rows, lanes, itemsize, sub, target)
    grid = (pl.cdiv(rows, rb), pl.cdiv(lanes, cb))
    tile_bytes = rb * cb * itemsize
    # 2 arrays x 2 buffers x tile, plus margin; fits every generation
    # (v7x physical VMEM is 64 MiB, so stay <= 48 MiB).
    vmem_limit = int(min(48 * 1024 * 1024,
                         max(32 * 1024 * 1024, 4 * tile_bytes + 8 * 1024 * 1024)))

    out = pl.pallas_call(
        _tile_copy_kernel,
        out_shape=jax.ShapeDtypeStruct((rows, lanes), flat.dtype),
        grid=grid,
        in_specs=[pl.BlockSpec((rb, cb), lambda i, j: (i, j))],
        out_specs=pl.BlockSpec((rb, cb), lambda i, j: (i, j)),
        compiler_params=pltpu.CompilerParams(
            dimension_semantics=("parallel", "parallel"),  # v7x: shard across 2 TCs
            vmem_limit_bytes=vmem_limit,
        ),
    )(slab)
    return out.reshape(n, feat)            # free metadata reshape back


# ---------------------------------------------------------------------------
# Public wrapper: torch Flatten semantics.
# ---------------------------------------------------------------------------
def flatten(x: jax.Array, *, materialize: bool = False, method: str = "dma") -> jax.Array:
    """Equivalent of torch `x.contiguous().view(x.size(0), -1)`.

    Default is the zero-cost metadata reshape (no kernel, no HBM traffic).
    With materialize=True an explicit Pallas copy produces a fresh HBM buffer:
      method="dma"   -> direct HBM->HBM DMA (recommended)
      method="tiled" -> BlockSpec identity copy through VMEM
    """
    n = x.shape[0]
    feat = math.prod(x.shape[1:])          # 1-D input -> (n, 1), same as view(n, -1)
    flat = x.reshape(n, feat)              # free: input is contiguous
    if not materialize or flat.size == 0:  # degenerate shapes: skip the kernel
        return flat
    if method == "dma":
        return _materialize_dma(flat)
    if method == "tiled":
        return _materialize_tiled(flat)
    raise ValueError(f"unknown method: {method!r}")


if __name__ == "__main__":
    k0, k1 = jax.random.split(jax.random.PRNGKey(0))

    # Primary shape: NCHW conv feature map, matching the torch module usage.
    N, C, H, W = 2, 4, 16, 16
    x = jax.random.normal(k0, (N, C, H, W), dtype=jnp.float32)
    ref = x.reshape(N, -1)                 # == torch .contiguous().view(N, -1)

    # 1) Default fast path: free reshape, no kernel, no HBM traffic.
    y0 = flatten(x)
    jax.block_until_ready(y0)
    assert y0.shape == (N, C * H * W) and y0.dtype == x.dtype
    assert jnp.array_equal(y0, ref)

    # 2) Forced materialization: direct HBM->HBM DMA kernel.
    y1 = flatten(x, materialize=True)
    jax.block_until_ready(y1)
    assert jnp.array_equal(y1, ref), "DMA-copy flatten mismatch"

    # 3) Forced materialization: tiled VMEM copy over the re-blocked slab.
    y2 = flatten(x, materialize=True, method="tiled")
    jax.block_until_ready(y2)
    assert jnp.array_equal(y2, ref), "tiled-copy flatten mismatch"

    # 4) Ragged feature size (H*W not a multiple of 128) + sub-32-bit dtype.
    x2 = jax.random.normal(k1, (2, 3, 7, 7), dtype=jnp.bfloat16)
    ref2 = x2.reshape(2, -1)
    y3 = flatten(x2, materialize=True)
    jax.block_until_ready(y3)
    assert jnp.array_equal(y3, ref2), "ragged DMA-copy mismatch"
    y4 = flatten(x2, materialize=True, method="tiled")
    jax.block_until_ready(y4)
    assert jnp.array_equal(y4, ref2), "ragged tiled-copy mismatch"

    print("KERNEL_OK")
</pallas_src>

<mosaic_0001>
module attributes {stable_mosaic.version = 11 : i64} {
  func.func @_hbm_copy_kernel(%arg0: memref<2x1024xf32, #tpu.memory_space<any>>, %arg1: memref<2x1024xf32, #tpu.memory_space<any>>, %arg2: memref<!tpu.dma_semaphore, #tpu.memory_space<semaphore_mem>>) attributes {dimension_semantics = [], scalar_prefetch = 0 : i64, scratch_operands = 1 : i64, tpu.core_type = #tpu.core_type<tc>} {
    tpu.enqueue_dma source(%arg0 : memref<2x1024xf32, #tpu.memory_space<any>>) target(%arg1 : memref<2x1024xf32, #tpu.memory_space<any>>) target_semaphore(%arg2 : memref<!tpu.dma_semaphore, #tpu.memory_space<semaphore_mem>>)
    tpu.wait_dma2 semaphore(%arg2 : memref<!tpu.dma_semaphore, #tpu.memory_space<semaphore_mem>>) src(%arg0 : memref<2x1024xf32, #tpu.memory_space<any>>) dst(%arg1 : memref<2x1024xf32, #tpu.memory_space<any>>)
    return
  }
}

</mosaic_0001>

<llo_original>
// kernel: tpu_custom_call.1
$region0: #{tpu_custom_call.1}
  #allocation0 [shape = 'u32[]', space=smem, size = 0x4, offset = 0x4, fixed_abs, tag = 'smem constant byte address 0x4 - core index']
  #allocation1 [shape = 'u32[72,128]{1,0:T(1,128)}', space=vmem, size = 0x9000, scoped, tag = 'internal scratch']
  #allocation2 [shape = 's32[1]{0}', space=sflag, size = 0x4, scoped, tag = 'scratch operand']
  #allocation3 [shape = 's32[]', space=sflag, size = 0x4, offset = 0, fixed_abs, tag = 'sflag constant byte address 0x0 - dummy sync flag']
  #allocation4 [shape = 'u32[0]{0}', space=smem, size = 0, offset = 0, fixed_abs, tag = 'smem constant byte address 0x0 - null']
  %s0 = inlined_call_operand.hbm [shape: f32[2,1024], index: 0, kind: input, shape index: {}]
  %s1 = inlined_call_operand.hbm [shape: f32[2,1024], index: 1, kind: output, shape index: {}]
  %s2 = sld [smem:[#allocation0]]
  $region2: #{tpu_custom_call.1} parent=0
    _
  %s4 = ssub.s32 1, %s2
  %s5 = scalar_select 0, %s4, %s2
  %s7 = sshll.u32 1, 14
  %s8 = sxor.u32 4294967295, %s7
  %s10 = sshll.u32 %s0, 4
  %s11 = int_to_ptr.hbm [resolvable:$true] %s10
  %s12 = sshll.u32 %s1, 4
  %s13 = int_to_ptr.hbm [resolvable:$true] %s12
  %16 = dma.general %s11, 256, %s13, [#allocation2], [#allocation3], [#allocation4], 0, 0
  %s17 = smul.u32 2, 1
  %s18 = smul.u32 %s17, 8
  %s19 = sshll.u32 %s18, 4
  %20 = dma.done [#allocation2], %s19
  %21 = vsyncmov [#allocation2]
  %s22 = vpop.sfrf %21
  %p23 = scmp.eq.s32.totalorder %s22, 0
  %p24 = pneg %p23
  %26 = shalt.err (%p24)

</llo_original>
